<compile_context>
chip_gen: v7x
topology: tpu7x:2x2x1
jax: 0.10.0
libtpu: 0.0.40
codegen_flags: <defaults>
</compile_context>

<pallas_src>
import functools

import jax
import jax.numpy as jnp
from jax import lax
from jax.experimental import pallas as pl
from jax.experimental.pallas import tpu as pltpu

# ---- model hyper-parameters (small, deterministic) ----
BATCH = 2
TIME = 128
KERNEL = 16
STRIDE = 8
N_FILT = 32
N_SRC = 2
SEQ = (TIME - KERNEL) // STRIDE + 1          # 15 real frames
SEQ_PAD = ((SEQ + 7) // 8) * 8               # 16 (sublane-aligned, last frame is pad)
DEC_LEN = (SEQ - 1) * STRIDE + KERNEL        # 128 == TIME

assert KERNEL == 2 * STRIDE                  # shift-and-add overlap-add (2 contributions/sample)
assert TIME % STRIDE == 0 and TIME // STRIDE == SEQ_PAD

# weight-slab row offsets (lanes always start at 0; all offsets are multiples of 8)
_R_ENC = 0                                   # 16 rows : w_enc           (16, 32)
_R_MASK = 16                                 # 32 rows : w_mask          (32, 64)
_R_BIAS = 48                                 # 1 row   : b_mask          (1, 64)
_R_DEC = 56                                  # 64 rows : block-diag w_dec (64, 32)
_R_SHIFT = 120                               # 2*M rows: shift_next, shift_prev (M, M) each


def _emd_kernel(wav_ref, slab_ref, out_ref, *, m):
    """Fused framing -> encoder -> masker -> apply_masks -> decoder -> overlap-add.

    wav_ref  : (m, STRIDE)            waveform chunks, row r = (batch, chunk)
    slab_ref : (120 + 2m, 128)        packed weights / bias / shift matrices
    out_ref  : (m, N_SRC*STRIDE)      overlap-added output, lanes = (src, sample-in-chunk)
    """
    slab = slab_ref[...]
    w_enc = slab[_R_ENC:_R_ENC + KERNEL, 0:N_FILT]                       # (16, 32)
    w_mask = slab[_R_MASK:_R_MASK + N_FILT, 0:N_SRC * N_FILT]            # (32, 64)
    b_mask = slab[_R_BIAS:_R_BIAS + 1, 0:N_SRC * N_FILT]                 # (1, 64)
    w_dec = slab[_R_DEC:_R_DEC + N_SRC * N_FILT, 0:N_SRC * KERNEL]       # (64, 32) block-diag
    s_next = slab[_R_SHIFT:_R_SHIFT + m, 0:m]                            # (m, m): row r <- r+1
    s_prev = slab[_R_SHIFT + m:_R_SHIFT + 2 * m, 0:m]                    # (m, m): row r <- r-1

    # --- im2col framing (KERNEL == 2*STRIDE): frame s = [chunk s, chunk s+1] ---
    w = wav_ref[...]                                                     # (m, 8)
    w_next = jnp.dot(s_next, w, preferred_element_type=jnp.float32)      # exact 0/1 matmul
    frames = jnp.concatenate([w, w_next], axis=-1)                       # (m, 16)

    # --- forward_encoder + enc_activation (ReLU) ---
    tf_rep = jnp.maximum(
        jnp.dot(frames, w_enc, preferred_element_type=jnp.float32), 0.0)  # (m, 32)

    # --- forward_masker: 1x1 conv + bias + ReLU ---
    masks = jnp.maximum(
        jnp.dot(tf_rep, w_mask, preferred_element_type=jnp.float32) + b_mask, 0.0)  # (m, 64)

    # --- apply_masks (sources side-by-side in lanes) + block-diagonal decoder dot ---
    masked = masks * jnp.concatenate([tf_rep, tf_rep], axis=-1)          # (m, 64)
    dec = jnp.dot(masked, w_dec, preferred_element_type=jnp.float32)     # (m, 32)

    # Zero the pad-frame rows so they can never leak into the overlap-add,
    # even if the encoder gains a bias / non-zero-preserving activation.
    row = lax.broadcasted_iota(jnp.int32, dec.shape, 0)
    dec = jnp.where((row % SEQ_PAD) < SEQ, dec, 0.0)

    # --- ConvTranspose1d overlap-add: out[r] = first_half[r] + second_half[r-1] ---
    dec_prev = jnp.dot(s_prev, dec, preferred_element_type=jnp.float32)  # row r <- dec[r-1]
    out = jnp.concatenate(
        [dec[:, s * KERNEL:s * KERNEL + STRIDE]
         + dec_prev[:, s * KERNEL + STRIDE:(s + 1) * KERNEL]
         for s in range(N_SRC)],
        axis=-1)                                                         # (m, N_SRC*STRIDE)
    out_ref[...] = out.astype(out_ref.dtype)


def _pack_weight_slab(w_enc, w_mask, b_mask, w_dec, m):
    """Pack all parameters + the two 0/1 shift matrices into one (rows, 128) slab."""
    rows = _R_SHIFT + 2 * m
    slab = jnp.zeros((rows, 128), jnp.float32)
    slab = slab.at[_R_ENC:_R_ENC + KERNEL, 0:N_FILT].set(w_enc.astype(jnp.float32))
    slab = slab.at[_R_MASK:_R_MASK + N_FILT, 0:N_SRC * N_FILT].set(w_mask.astype(jnp.float32))
    slab = slab.at[_R_BIAS:_R_BIAS + 1, 0:N_SRC * N_FILT].set(b_mask.astype(jnp.float32))
    w_dec_bd = jnp.kron(jnp.eye(N_SRC, dtype=jnp.float32), w_dec.astype(jnp.float32))  # (64, 32)
    slab = slab.at[_R_DEC:_R_DEC + N_SRC * N_FILT, 0:N_SRC * KERNEL].set(w_dec_bd)
    r = jnp.arange(m)
    # shift_next[r, r+1] = 1 unless r is the per-batch pad frame (r % 16 == 15)
    nxt = ((r[None, :] == r[:, None] + 1)
           & ((r[:, None] % SEQ_PAD) != SEQ_PAD - 1)).astype(jnp.float32)
    # shift_prev[r, r-1] = 1 unless r is the first frame of its batch (r % 16 == 0)
    prv = ((r[None, :] == r[:, None] - 1)
           & ((r[:, None] % SEQ_PAD) != 0)).astype(jnp.float32)
    slab = slab.at[_R_SHIFT:_R_SHIFT + m, 0:m].set(nxt)
    slab = slab.at[_R_SHIFT + m:_R_SHIFT + 2 * m, 0:m].set(prv)
    return slab


@jax.jit
def encoder_masker_decoder_forward(wav, w_enc, w_mask, b_mask, w_dec):
    """Full BaseEncoderMaskerDecoder.forward. `wav` is 1D, 2D or 3D, time last."""
    orig_ndim = wav.ndim
    # _unsqueeze_to_3d
    if wav.ndim == 1:
        wav3d = wav.reshape(1, 1, -1)
    elif wav.ndim == 2:
        wav3d = wav[:, None, :]
    else:
        wav3d = wav
    B, _, T = wav3d.shape
    assert T == TIME
    m = B * SEQ_PAD

    # Free, contiguous reshape: (B, T) -> (B*T/STRIDE, STRIDE) chunk rows.
    chunks = wav3d[:, 0, :].astype(jnp.float32).reshape(m, STRIDE)
    slab = _pack_weight_slab(w_enc, w_mask, b_mask, w_dec, m)

    flops = (2 * m * m * STRIDE                              # framing shift matmul
             + 2 * m * KERNEL * N_FILT                       # encoder
             + 2 * m * N_FILT * (N_SRC * N_FILT)             # masker
             + 2 * m * (N_SRC * N_FILT) * (N_SRC * KERNEL)   # decoder (block-diag)
             + 2 * m * m * (N_SRC * KERNEL))                 # overlap-add shift matmul
    bytes_accessed = 4 * (chunks.size + slab.size + m * N_SRC * STRIDE)

    vmem = pl.BlockSpec(memory_space=pltpu.MemorySpace.VMEM)
    out = pl.pallas_call(
        functools.partial(_emd_kernel, m=m),
        out_shape=jax.ShapeDtypeStruct((m, N_SRC * STRIDE), jnp.float32),
        in_specs=[vmem, vmem],
        out_specs=vmem,
        cost_estimate=pl.CostEstimate(
            flops=flops, transcendentals=0, bytes_accessed=bytes_accessed),
    )(chunks, slab)

    # rows are (b, frame), lanes are (src, sample-in-chunk) -> (B, n_src, time)
    decoded = (out.reshape(B, SEQ_PAD, N_SRC, STRIDE)
                  .transpose(0, 2, 1, 3)
                  .reshape(B, N_SRC, SEQ_PAD * STRIDE))

    # pad_x_to_y: pad/trim decoded to the input length T
    dlen = decoded.shape[-1]
    if dlen < T:
        decoded = jnp.pad(decoded, ((0, 0), (0, 0), (0, T - dlen)))
    elif dlen > T:
        decoded = decoded[..., :T]

    # _shape_reconstructed
    if orig_ndim == 1:
        return decoded[0]                                    # (n_src, T)
    return decoded                                           # (B, n_src, T)


def _reference_forward(wav, w_enc, w_mask, b_mask, w_dec):
    """Pure-JAX reference (same math, PyTorch (batch, feat, seq) convention)."""
    if wav.ndim == 1:
        wav3d = wav.reshape(1, 1, -1)
    elif wav.ndim == 2:
        wav3d = wav[:, None, :]
    else:
        wav3d = wav
    B = wav3d.shape[0]
    idx = jnp.arange(SEQ)[:, None] * STRIDE + jnp.arange(KERNEL)[None, :]
    frames = wav3d[:, 0, :][:, idx]                                   # (B, SEQ, K)
    tf = jnp.maximum(jnp.einsum("bsk,kn->bns", frames, w_enc), 0.0)   # (B, N, SEQ)
    pre = jnp.einsum("bns,nm->bms", tf, w_mask) + b_mask[0][None, :, None]
    masks = jnp.maximum(pre, 0.0).reshape(B, N_SRC, N_FILT, SEQ)
    masked = masks * tf[:, None]                                      # apply_masks
    frames_out = jnp.einsum("bcns,nk->bcsk", masked, w_dec)           # (B, n_src, SEQ, K)
    flat_idx = idx.reshape(-1)
    dec = jnp.zeros((B, N_SRC, DEC_LEN), jnp.float32)
    dec = dec.at[:, :, flat_idx].add(frames_out.reshape(B, N_SRC, -1))
    return dec[..., :TIME]


if __name__ == "__main__":
    key = jax.random.PRNGKey(0)
    k_wav, k_enc, k_msk, k_bms, k_dec = jax.random.split(key, 5)

    wav = jax.random.normal(k_wav, (BATCH, TIME), jnp.float32)        # 2D input, time last
    w_enc = jax.random.normal(k_enc, (KERNEL, N_FILT), jnp.float32) * 0.1
    w_mask = jax.random.normal(k_msk, (N_FILT, N_SRC * N_FILT), jnp.float32) * 0.1
    b_mask = jax.random.normal(k_bms, (1, N_SRC * N_FILT), jnp.float32) * 0.01
    w_dec = jax.random.normal(k_dec, (N_FILT, KERNEL), jnp.float32) * 0.1

    out = encoder_masker_decoder_forward(wav, w_enc, w_mask, b_mask, w_dec)
    out = jax.block_until_ready(out)
    assert out.shape == (BATCH, N_SRC, TIME), out.shape

    ref = _reference_forward(wav, w_enc, w_mask, b_mask, w_dec)
    assert jnp.allclose(out, ref, atol=1e-4, rtol=1e-4), float(jnp.max(jnp.abs(out - ref)))

    print("KERNEL_OK")
</pallas_src>

<mosaic_0001>
module attributes {stable_mosaic.version = 11 : i64} {
  func.func @_emd_kernel(%arg0: memref<32x8xf32, #tpu.memory_space<vmem>>, %arg1: memref<184x128xf32, #tpu.memory_space<vmem>>, %arg2: memref<32x16xf32, #tpu.memory_space<vmem>>) attributes {dimension_semantics = [], scalar_prefetch = 0 : i64, scratch_operands = 0 : i64, tpu.core_type = #tpu.core_type<tc>} {
    %c0 = arith.constant 0 : index
    %c0_0 = arith.constant 0 : index
    %0 = vector.load %arg1[%c0, %c0_0] : memref<184x128xf32, #tpu.memory_space<vmem>>, vector<184x128xf32>
    %1 = vector.extract_strided_slice %0 {offsets = [0, 0], sizes = [16, 32], strides = [1, 1]} : vector<184x128xf32> to vector<16x32xf32>
    %2 = vector.extract_strided_slice %0 {offsets = [16, 0], sizes = [32, 64], strides = [1, 1]} : vector<184x128xf32> to vector<32x64xf32>
    %3 = vector.extract_strided_slice %0 {offsets = [48, 0], sizes = [1, 64], strides = [1, 1]} : vector<184x128xf32> to vector<1x64xf32>
    %4 = vector.extract_strided_slice %0 {offsets = [56, 0], sizes = [64, 32], strides = [1, 1]} : vector<184x128xf32> to vector<64x32xf32>
    %5 = vector.extract_strided_slice %0 {offsets = [120, 0], sizes = [32, 32], strides = [1, 1]} : vector<184x128xf32> to vector<32x32xf32>
    %6 = vector.extract_strided_slice %0 {offsets = [152, 0], sizes = [32, 32], strides = [1, 1]} : vector<184x128xf32> to vector<32x32xf32>
    %c0_1 = arith.constant 0 : index
    %c0_2 = arith.constant 0 : index
    %7 = vector.load %arg0[%c0_1, %c0_2] : memref<32x8xf32, #tpu.memory_space<vmem>>, vector<32x8xf32>
    %cst = arith.constant dense<0.000000e+00> : vector<32x8xf32>
    %8 = tpu.matmul %5, %7, %cst {dimension_numbers = #tpu.dot_dimension_numbers<[1], [0], [0], [1], [0, 0, 1, 1], [], []>} : vector<32x32xf32>, vector<32x8xf32>, vector<32x8xf32> -> vector<32x8xf32>
    %9 = tpu.concatenate %7, %8 in 1 : vector<32x8xf32>, vector<32x8xf32> -> vector<32x16xf32>
    %cst_3 = arith.constant dense<0.000000e+00> : vector<32x32xf32>
    %10 = tpu.matmul %9, %1, %cst_3 {dimension_numbers = #tpu.dot_dimension_numbers<[1], [0], [0], [1], [0, 0, 1, 1], [], []>} : vector<32x16xf32>, vector<16x32xf32>, vector<32x32xf32> -> vector<32x32xf32>
    %cst_4 = arith.constant 0.000000e+00 : f32
    %11 = vector.broadcast %cst_4 : f32 to vector<32x32xf32>
    %12 = arith.maximumf %10, %11 : vector<32x32xf32>
    %cst_5 = arith.constant dense<0.000000e+00> : vector<32x64xf32>
    %13 = tpu.matmul %12, %2, %cst_5 {dimension_numbers = #tpu.dot_dimension_numbers<[1], [0], [0], [1], [0, 0, 1, 1], [], []>} : vector<32x32xf32>, vector<32x64xf32>, vector<32x64xf32> -> vector<32x64xf32>
    %14 = vector.broadcast %3 : vector<1x64xf32> to vector<32x64xf32>
    %15 = arith.addf %13, %14 : vector<32x64xf32>
    %cst_6 = arith.constant 0.000000e+00 : f32
    %16 = vector.broadcast %cst_6 : f32 to vector<32x64xf32>
    %17 = arith.maximumf %15, %16 : vector<32x64xf32>
    %18 = tpu.concatenate %12, %12 in 1 : vector<32x32xf32>, vector<32x32xf32> -> vector<32x64xf32>
    %19 = arith.mulf %17, %18 : vector<32x64xf32>
    %cst_7 = arith.constant dense<0.000000e+00> : vector<32x32xf32>
    %20 = tpu.matmul %19, %4, %cst_7 {dimension_numbers = #tpu.dot_dimension_numbers<[1], [0], [0], [1], [0, 0, 1, 1], [], []>} : vector<32x64xf32>, vector<64x32xf32>, vector<32x32xf32> -> vector<32x32xf32>
    %21 = tpu.iota {dimensions = array<i32: 0>} : vector<32x32xi32>
    %c16_i32 = arith.constant 16 : i32
    %c0_i32 = arith.constant 0 : i32
    %22 = arith.cmpi eq, %c16_i32, %c0_i32 : i32
    %c1_i32 = arith.constant 1 : i32
    %23 = arith.select %22, %c1_i32, %c16_i32 : i32
    %24 = vector.broadcast %23 : i32 to vector<32x32xi32>
    %25 = arith.remsi %21, %24 : vector<32x32xi32>
    %c0_i32_8 = arith.constant 0 : i32
    %26 = vector.broadcast %c0_i32_8 : i32 to vector<32x32xi32>
    %27 = arith.cmpi ne, %25, %26 : vector<32x32xi32>
    %c0_i32_9 = arith.constant 0 : i32
    %28 = vector.broadcast %c0_i32_9 : i32 to vector<32x32xi32>
    %29 = arith.cmpi slt, %25, %28 : vector<32x32xi32>
    %c0_i32_10 = arith.constant 0 : i32
    %30 = arith.cmpi slt, %23, %c0_i32_10 : i32
    %31 = vector.broadcast %30 : i1 to vector<32x32xi1>
    %32 = vector.broadcast %31 : vector<32x32xi1> to vector<32x32xi1>
    %33 = arith.xori %29, %32 : vector<32x32xi1>
    %34 = arith.andi %33, %27 : vector<32x32xi1>
    %35 = vector.broadcast %23 : i32 to vector<32x32xi32>
    %36 = arith.addi %25, %35 : vector<32x32xi32>
    %37 = arith.select %34, %36, %25 : vector<32x32xi1>, vector<32x32xi32>
    %c15_i32 = arith.constant 15 : i32
    %38 = vector.broadcast %c15_i32 : i32 to vector<32x32xi32>
    %39 = arith.cmpi slt, %37, %38 : vector<32x32xi32>
    %cst_11 = arith.constant 0.000000e+00 : f32
    %40 = vector.broadcast %cst_11 : f32 to vector<32x32xf32>
    %41 = arith.select %39, %20, %40 : vector<32x32xi1>, vector<32x32xf32>
    %cst_12 = arith.constant dense<0.000000e+00> : vector<32x32xf32>
    %42 = tpu.matmul %6, %41, %cst_12 {dimension_numbers = #tpu.dot_dimension_numbers<[1], [0], [0], [1], [0, 0, 1, 1], [], []>} : vector<32x32xf32>, vector<32x32xf32>, vector<32x32xf32> -> vector<32x32xf32>
    %43 = vector.extract_strided_slice %41 {offsets = [0, 0], sizes = [32, 8], strides = [1, 1]} : vector<32x32xf32> to vector<32x8xf32>
    %44 = vector.extract_strided_slice %42 {offsets = [0, 8], sizes = [32, 8], strides = [1, 1]} : vector<32x32xf32> to vector<32x8xf32>
    %45 = arith.addf %43, %44 : vector<32x8xf32>
    %46 = vector.extract_strided_slice %41 {offsets = [0, 16], sizes = [32, 8], strides = [1, 1]} : vector<32x32xf32> to vector<32x8xf32>
    %47 = vector.extract_strided_slice %42 {offsets = [0, 24], sizes = [32, 8], strides = [1, 1]} : vector<32x32xf32> to vector<32x8xf32>
    %48 = arith.addf %46, %47 : vector<32x8xf32>
    %49 = tpu.concatenate %45, %48 in 1 : vector<32x8xf32>, vector<32x8xf32> -> vector<32x16xf32>
    %c0_13 = arith.constant 0 : index
    %c0_14 = arith.constant 0 : index
    %50 = vector.load %arg2[%c0_13, %c0_14] : memref<32x16xf32, #tpu.memory_space<vmem>>, vector<32x16xf32>
    tpu.vector_store %arg2[%c0_13, %c0_14], %49 {strides = array<i32>} : memref<32x16xf32, #tpu.memory_space<vmem>>, vector<32x16xf32>,
    return
  }
}

</mosaic_0001>

<llo_original>
// kernel: encoder_masker_decoder_forward.1
$region0: #{encoder_masker_decoder_forward.1}
  #allocation0 [shape = 'u32[]', space=smem, size = 0x4, offset = 0x4, fixed_abs, tag = 'smem constant byte address 0x4 - core index']
  #allocation1 [shape = 'u32[144,128]{1,0:T(1,128)}', space=vmem, size = 0x12000, scoped, tag = 'internal scratch']
  %s0 = inlined_call_operand.vmem [shape: f32[32,8], index: 0, kind: input, shape index: {}]
  %s1 = inlined_call_operand.vmem [shape: f32[184,128], index: 1, kind: input, shape index: {}]
  %s2 = inlined_call_operand.vmem [shape: f32[32,16], index: 2, kind: output, shape index: {}]
  %s3 = sld [smem:[#allocation0]]
  $region18: #{encoder_masker_decoder_forward.1} parent=0
    _
  %s5 = ssub.s32 1, %s3
  %s6 = scalar_select 0, %s5, %s3
  // Predicated region
  $region2: #{encoder_masker_decoder_forward.1} parent=0 // pred_check
    _
  $region3: #{encoder_masker_decoder_forward.1} parent=0 // pred_check_branch
    %8 = sbr.rel (0) target = $region5
  $region4: #{encoder_masker_decoder_forward.1} parent=0 // pred_region
    _
  $region5: #{encoder_masker_decoder_forward.1} parent=0 // pred_fallthru
    _
  // Predicated region
  $region6: #{encoder_masker_decoder_forward.1} parent=0 // pred_check
    _
  $region7: #{encoder_masker_decoder_forward.1} parent=0 // pred_check_branch
    %10 = sbr.rel (0) target = $region9
  $region8: #{encoder_masker_decoder_forward.1} parent=0 // pred_region
    _
  $region9: #{encoder_masker_decoder_forward.1} parent=0 // pred_fallthru
    _
  %v11 = vld [vmem:[%s1] sm:$0xff]
  %v12 = vld [vmem:[%s1 + $0x8] sm:$0xff]
  %v13 = vld [vmem:[%s1 + $0x10] sm:$0xff]
  %v14 = vld [vmem:[%s1 + $0x18] sm:$0xff]
  %v15 = vld [vmem:[%s1 + $0x20] sm:$0xff]
  %v16 = vld [vmem:[%s1 + $0x28] sm:$0xff]
  %v17 = vld [vmem:[%s1 + $0x30] sm:$0xff]
  %v18 = vld [vmem:[%s1 + $0x38] sm:$0xff]
  %v19 = vld [vmem:[%s1 + $0x40] sm:$0xff]
  %v20 = vld [vmem:[%s1 + $0x48] sm:$0xff]
  %v21 = vld [vmem:[%s1 + $0x50] sm:$0xff]
  %v22 = vld [vmem:[%s1 + $0x58] sm:$0xff]
  %v23 = vld [vmem:[%s1 + $0x60] sm:$0xff]
  %v24 = vld [vmem:[%s1 + $0x68] sm:$0xff]
  %v25 = vld [vmem:[%s1 + $0x70] sm:$0xff]
  %v26 = vld [vmem:[%s1 + $0x78] sm:$0xff]
  %v27 = vld [vmem:[%s1 + $0x80] sm:$0xff]
  %v28 = vld [vmem:[%s1 + $0x88] sm:$0xff]
  %v29 = vld [vmem:[%s1 + $0x90] sm:$0xff]
  %v30 = vld [vmem:[%s1 + $0x98] sm:$0xff]
  %v31 = vld [vmem:[%s1 + $0xa0] sm:$0xff]
  %v32 = vld [vmem:[%s1 + $0xa8] sm:$0xff]
  %v33 = vld [vmem:[%s1 + $0xb0] sm:$0xff]
  %v34 = vld [vmem:[%s0] sm:$0xff]
  %v35 = vld [vmem:[%s0 + $0x8] sm:$0xff]
  %v36 = vld [vmem:[%s0 + $0x10] sm:$0xff]
  %v37 = vld [vmem:[%s0 + $0x18] sm:$0xff]
  %vm38 = vcmask 261120
  %v40 = vsel %vm38, %v26, 0
  %v43 = vsel %vm38, %v27, 0
  %v46 = vsel %vm38, %v28, 0
  %v49 = vsel %vm38, %v29, 0
  %51 = vmatprep.subr.mxu0 0.0
  %52 = vmatpush1.msra.mxu0 %v34
  %53 = vmatprep.subr.mxu0 0.0
  %54 = vmatpush1.msra.mxu0 %v35
  %55 = vmatprep.subr.mxu0 0.0
  %56 = vmatpush1.msra.mxu0 %v36
  %57 = vmatprep.subr.mxu0 0.0
  %58 = vmatpush1.msra.mxu0 %v37
  %59 = vmatprep.subr.mxu0 0.0
  %60 = vmatpush1.msra.mxu0 0.0
  %61 = vmatprep.subr.mxu0 0.0
  %62 = vmatpush1.msra.mxu0 0.0
  %63 = vmatprep.subr.mxu0 0.0
  %64 = vmatpush1.msra.mxu0 0.0
  %65 = vmatprep.subr.mxu0 0.0
  %66 = vmatpush1.msra.mxu0 0.0
  %67 = vmatprep.subr.mxu0 0.0
  %68 = vmatpush1.msra.mxu0 0.0
  %69 = vmatprep.subr.mxu0 0.0
  %70 = vmatpush1.msra.mxu0 0.0
  %71 = vmatprep.subr.mxu0 0.0
  %72 = vmatpush1.msra.mxu0 0.0
  %73 = vmatprep.subr.mxu0 0.0
  %74 = vmatpush1.msra.mxu0 0.0
  %75 = vmatprep.subr.mxu0 0.0
  %76 = vmatpush1.msra.mxu0 0.0
  %77 = vmatprep.subr.mxu0 0.0
  %78 = vmatpush1.msra.mxu0 0.0
  %79 = vmatprep.subr.mxu0 0.0
  %80 = vmatpush1.msra.mxu0 0.0
  %81 = vmatprep.subr.mxu0 0.0
  %82 = vmatpush1.msra.mxu0 0.0
  %83 = vmatprep.subr.mxu0 0.0
  %84 = vmatpush1.msra.mxu0 0.0
  %85 = vmatprep.subr.mxu0 0.0
  %86 = vmatpush1.msra.mxu0 0.0
  %87 = vmatprep.subr.mxu0 0.0
  %88 = vmatpush1.msra.mxu0 0.0
  %89 = vmatprep.subr.mxu0 0.0
  %90 = vmatpush1.msra.mxu0 0.0
  %91 = vmatprep.subr.mxu0 0.0
  %92 = vmatpush1.msra.mxu0 0.0
  %93 = vmatprep.subr.mxu0 0.0
  %94 = vmatpush1.msra.mxu0 0.0
  %95 = vmatprep.subr.mxu0 0.0
  %96 = vmatpush1.msra.mxu0 0.0
  %97 = vmatprep.subr.mxu0 0.0
  %98 = vmatpush1.msra.mxu0 0.0
  %99 = vmatprep.subr.mxu0 0.0
  %100 = vmatpush1.msra.mxu0 0.0
  %101 = vmatprep.subr.mxu0 0.0
  %102 = vmatpush1.msra.mxu0 0.0
  %103 = vmatprep.subr.mxu0 0.0
  %104 = vmatpush1.msra.mxu0 0.0
  %105 = vmatprep.subr.mxu0 0.0
  %106 = vmatpush1.msra.mxu0 0.0
  %107 = vmatprep.subr.mxu0 0.0
  %108 = vmatpush1.msra.mxu0 0.0
  %109 = vmatprep.subr.mxu0 0.0
  %110 = vmatpush1.msra.mxu0 0.0
  %111 = vmatprep.subr.mxu0 0.0
  %112 = vmatpush1.msra.mxu0 0.0
  %113 = vmatprep.subr.mxu0 0.0
  %114 = vmatpush1.msra.mxu0 0.0
  %115 = vmatprep.mubr.f32.mxu0 0.0
  %116 = vmatmul.mubr.f32.gmra.mrb[0].mxu0 %v40
  %v117 = vpop.f32.mrb[0].mxu0
  %v118 = vadd.f32 0.0, %v117
  %v119 = vpop.f32.mrb[0].mxu0
  %120 = vmatprep.mubr.f32.mxu0 0.0
  %121 = vmatmul.mubr.f32.gmra.mrb[0].mxu0 %v43
  %v122 = vpop.f32.mrb[0].mxu0
  %v123 = vadd.f32 0.0, %v122
  %v124 = vpop.f32.mrb[0].mxu0
  %125 = vmatprep.mubr.f32.mxu0 0.0
  %126 = vmatmul.mubr.f32.gmra.mrb[0].mxu0 %v46
  %v127 = vpop.f32.mrb[0].mxu0
  %v128 = vadd.f32 0.0, %v127
  %v129 = vpop.f32.mrb[0].mxu0
  %130 = vmatprep.mubr.f32.mxu0 0.0
  %131 = vmatmul.mubr.f32.gmra.mrb[0].mxu0 %v49
  %v132 = vpop.f32.mrb[0].mxu0
  %v133 = vadd.f32 0.0, %v132
  %v134 = vpop.f32.mrb[0].mxu0
  %135 = vdwg.mxu0
  %140 = vrot.lane.b32.xlu0 %v118, 8
  %v141 = vpop.permute.xlu0 %140
  %142 = vrot.lane.b32.xlu0 %v123, 8
  %v143 = vpop.permute.xlu0 %142
  %144 = vrot.lane.b32.xlu0 %v128, 8
  %v145 = vpop.permute.xlu0 %144
  %146 = vrot.lane.b32.xlu0 %v133, 8
  %v147 = vpop.permute.xlu0 %146
  %vm152 = vcmask 64512
  %v153 = vsel %vm152, %v34, %v141
  %v154 = vsel %vm152, %v35, %v143
  %v155 = vsel %vm152, %v36, %v145
  %v156 = vsel %vm152, %v37, %v147
  %vm157 = vcmask 130048
  %v159 = vsel %vm157, %v153, 0
  %v162 = vsel %vm157, %v154, 0
  %v165 = vsel %vm157, %v155, 0
  %v168 = vsel %vm157, %v156, 0
  %170 = vmatprep.subr.mxu0 0.0
  %171 = vmatpush1.msra.mxu0 %v11
  %172 = vmatprep.subr.mxu0 0.0
  %173 = vmatpush1.msra.mxu0 %v12
  %174 = vmatprep.subr.mxu0 0.0
  %175 = vmatpush1.msra.mxu0 0.0
  %176 = vmatprep.subr.mxu0 0.0
  %177 = vmatpush1.msra.mxu0 0.0
  %178 = vmatprep.subr.mxu0 0.0
  %179 = vmatpush1.msra.mxu0 0.0
  %180 = vmatprep.subr.mxu0 0.0
  %181 = vmatpush1.msra.mxu0 0.0
  %182 = vmatprep.subr.mxu0 0.0
  %183 = vmatpush1.msra.mxu0 0.0
  %184 = vmatprep.subr.mxu0 0.0
  %185 = vmatpush1.msra.mxu0 0.0
  %186 = vmatprep.subr.mxu0 0.0
  %187 = vmatpush1.msra.mxu0 0.0
  %188 = vmatprep.subr.mxu0 0.0
  %189 = vmatpush1.msra.mxu0 0.0
  %190 = vmatprep.subr.mxu0 0.0
  %191 = vmatpush1.msra.mxu0 0.0
  %192 = vmatprep.subr.mxu0 0.0
  %193 = vmatpush1.msra.mxu0 0.0
  %194 = vmatprep.subr.mxu0 0.0
  %195 = vmatpush1.msra.mxu0 0.0
  %196 = vmatprep.subr.mxu0 0.0
  %197 = vmatpush1.msra.mxu0 0.0
  %198 = vmatprep.subr.mxu0 0.0
  %199 = vmatpush1.msra.mxu0 0.0
  %200 = vmatprep.subr.mxu0 0.0
  %201 = vmatpush1.msra.mxu0 0.0
  %202 = vmatprep.subr.mxu0 0.0
  %203 = vmatpush1.msra.mxu0 0.0
  %204 = vmatprep.subr.mxu0 0.0
  %205 = vmatpush1.msra.mxu0 0.0
  %206 = vmatprep.subr.mxu0 0.0
  %207 = vmatpush1.msra.mxu0 0.0
  %208 = vmatprep.subr.mxu0 0.0
  %209 = vmatpush1.msra.mxu0 0.0
  %210 = vmatprep.subr.mxu0 0.0
  %211 = vmatpush1.msra.mxu0 0.0
  %212 = vmatprep.subr.mxu0 0.0
  %213 = vmatpush1.msra.mxu0 0.0
  %214 = vmatprep.subr.mxu0 0.0
  %215 = vmatpush1.msra.mxu0 0.0
  %216 = vmatprep.subr.mxu0 0.0
  %217 = vmatpush1.msra.mxu0 0.0
  %218 = vmatprep.subr.mxu0 0.0
  %219 = vmatpush1.msra.mxu0 0.0
  %220 = vmatprep.subr.mxu0 0.0
  %221 = vmatpush1.msra.mxu0 0.0
  %222 = vmatprep.subr.mxu0 0.0
  %223 = vmatpush1.msra.mxu0 0.0
  %224 = vmatprep.subr.mxu0 0.0
  %225 = vmatpush1.msra.mxu0 0.0
  %226 = vmatprep.subr.mxu0 0.0
  %227 = vmatpush1.msra.mxu0 0.0
  %228 = vmatprep.subr.mxu0 0.0
  %229 = vmatpush1.msra.mxu0 0.0
  %230 = vmatprep.subr.mxu0 0.0
  %231 = vmatpush1.msra.mxu0 0.0
  %232 = vmatprep.subr.mxu0 0.0
  %233 = vmatpush1.msra.mxu0 0.0
  %234 = vmatprep.mubr.f32.mxu0 0.0
  %235 = vmatmul.mubr.f32.gmra.mrb[0].mxu0 %v159
  %v236 = vpop.f32.mrb[0].mxu0
  %v237 = vadd.f32 0.0, %v236
  %v238 = vpop.f32.mrb[0].mxu0
  %239 = vmatprep.mubr.f32.mxu0 0.0
  %240 = vmatmul.mubr.f32.gmra.mrb[0].mxu0 %v162
  %v241 = vpop.f32.mrb[0].mxu0
  %v242 = vadd.f32 0.0, %v241
  %v243 = vpop.f32.mrb[0].mxu0
  %244 = vmatprep.mubr.f32.mxu0 0.0
  %245 = vmatmul.mubr.f32.gmra.mrb[0].mxu0 %v165
  %v246 = vpop.f32.mrb[0].mxu0
  %v247 = vadd.f32 0.0, %v246
  %v248 = vpop.f32.mrb[0].mxu0
  %249 = vmatprep.mubr.f32.mxu0 0.0
  %250 = vmatmul.mubr.f32.gmra.mrb[0].mxu0 %v168
  %v251 = vpop.f32.mrb[0].mxu0
  %v252 = vadd.f32 0.0, %v251
  %v253 = vpop.f32.mrb[0].mxu0
  %254 = vdwg.mxu0
  %v255 = vmax.f32 %v237, 0.0
  %v256 = vmax.f32 %v242, 0.0
  %v257 = vmax.f32 %v247, 0.0
  %v258 = vmax.f32 %v252, 0.0
  %v259 = vlaneseq
  %v260 = vshrl.u32 %v259, 7
  %v261 = vsub.s32 0, %v260
  %v262 = vrot.slane %v17, %v261
  %v264 = vsel %vm38, %v255, 0
  %v267 = vsel %vm38, %v256, 0
  %v270 = vsel %vm38, %v257, 0
  %v273 = vsel %vm38, %v258, 0
  %275 = vmatprep.subr.mxu0 0.0
  %276 = vmatpush1.msra.mxu0 %v13
  %277 = vmatprep.subr.mxu0 0.0
  %278 = vmatpush1.msra.mxu0 %v14
  %279 = vmatprep.subr.mxu0 0.0
  %280 = vmatpush1.msra.mxu0 %v15
  %281 = vmatprep.subr.mxu0 0.0
  %282 = vmatpush1.msra.mxu0 %v16
  %283 = vmatprep.subr.mxu0 0.0
  %284 = vmatpush1.msra.mxu0 0.0
  %285 = vmatprep.subr.mxu0 0.0
  %286 = vmatpush1.msra.mxu0 0.0
  %287 = vmatprep.subr.mxu0 0.0
  %288 = vmatpush1.msra.mxu0 0.0
  %289 = vmatprep.subr.mxu0 0.0
  %290 = vmatpush1.msra.mxu0 0.0
  %291 = vmatprep.subr.mxu0 0.0
  %292 = vmatpush1.msra.mxu0 0.0
  %293 = vmatprep.subr.mxu0 0.0
  %294 = vmatpush1.msra.mxu0 0.0
  %295 = vmatprep.subr.mxu0 0.0
  %296 = vmatpush1.msra.mxu0 0.0
  %297 = vmatprep.subr.mxu0 0.0
  %298 = vmatpush1.msra.mxu0 0.0
  %299 = vmatprep.subr.mxu0 0.0
  %300 = vmatpush1.msra.mxu0 0.0
  %301 = vmatprep.subr.mxu0 0.0
  %302 = vmatpush1.msra.mxu0 0.0
  %303 = vmatprep.subr.mxu0 0.0
  %304 = vmatpush1.msra.mxu0 0.0
  %305 = vmatprep.subr.mxu0 0.0
  %306 = vmatpush1.msra.mxu0 0.0
  %307 = vmatprep.subr.mxu0 0.0
  %308 = vmatpush1.msra.mxu0 0.0
  %309 = vmatprep.subr.mxu0 0.0
  %310 = vmatpush1.msra.mxu0 0.0
  %311 = vmatprep.subr.mxu0 0.0
  %312 = vmatpush1.msra.mxu0 0.0
  %313 = vmatprep.subr.mxu0 0.0
  %314 = vmatpush1.msra.mxu0 0.0
  %315 = vmatprep.subr.mxu0 0.0
  %316 = vmatpush1.msra.mxu0 0.0
  %317 = vmatprep.subr.mxu0 0.0
  %318 = vmatpush1.msra.mxu0 0.0
  %319 = vmatprep.subr.mxu0 0.0
  %320 = vmatpush1.msra.mxu0 0.0
  %321 = vmatprep.subr.mxu0 0.0
  %322 = vmatpush1.msra.mxu0 0.0
  %323 = vmatprep.subr.mxu0 0.0
  %324 = vmatpush1.msra.mxu0 0.0
  %325 = vmatprep.subr.mxu0 0.0
  %326 = vmatpush1.msra.mxu0 0.0
  %327 = vmatprep.subr.mxu0 0.0
  %328 = vmatpush1.msra.mxu0 0.0
  %329 = vmatprep.subr.mxu0 0.0
  %330 = vmatpush1.msra.mxu0 0.0
  %331 = vmatprep.subr.mxu0 0.0
  %332 = vmatpush1.msra.mxu0 0.0
  %333 = vmatprep.subr.mxu0 0.0
  %334 = vmatpush1.msra.mxu0 0.0
  %335 = vmatprep.subr.mxu0 0.0
  %336 = vmatpush1.msra.mxu0 0.0
  %337 = vmatprep.subr.mxu0 0.0
  %338 = vmatpush1.msra.mxu0 0.0
  %339 = vmatprep.mubr.f32.mxu0 0.0
  %340 = vmatmul.mubr.f32.gmra.mrb[0].mxu0 %v264
  %v341 = vpop.f32.mrb[0].mxu0
  %v342 = vadd.f32 %v262, %v341
  %v343 = vpop.f32.mrb[0].mxu0
  %344 = vmatprep.mubr.f32.mxu0 0.0
  %345 = vmatmul.mubr.f32.gmra.mrb[0].mxu0 %v267
  %v346 = vpop.f32.mrb[0].mxu0
  %v347 = vadd.f32 %v262, %v346
  %v348 = vpop.f32.mrb[0].mxu0
  %349 = vmatprep.mubr.f32.mxu0 0.0
  %350 = vmatmul.mubr.f32.gmra.mrb[0].mxu0 %v270
  %v351 = vpop.f32.mrb[0].mxu0
  %v352 = vadd.f32 %v262, %v351
  %v353 = vpop.f32.mrb[0].mxu0
  %354 = vmatprep.mubr.f32.mxu0 0.0
  %355 = vmatmul.mubr.f32.gmra.mrb[0].mxu0 %v273
  %v356 = vpop.f32.mrb[0].mxu0
  %v357 = vadd.f32 %v262, %v356
  %v358 = vpop.f32.mrb[0].mxu0
  %359 = vdwg.mxu0
  %v360 = vmax.f32 %v342, 0.0
  %v361 = vmax.f32 %v347, 0.0
  %v362 = vmax.f32 %v352, 0.0
  %v363 = vmax.f32 %v357, 0.0
  %364 = vrot.lane.b32.xlu0 %v255, 32
  %v365 = vpop.permute.xlu0 %364
  %366 = vrot.lane.b32.xlu0 %v256, 32
  %v367 = vpop.permute.xlu0 %366
  %368 = vrot.lane.b32.xlu0 %v257, 32
  %v369 = vpop.permute.xlu0 %368
  %370 = vrot.lane.b32.xlu0 %v258, 32
  %v371 = vpop.permute.xlu0 %370
  %v376 = vsel %vm38, %v255, %v365
  %v377 = vsel %vm38, %v256, %v367
  %v378 = vsel %vm38, %v257, %v369
  %v379 = vsel %vm38, %v258, %v371
  %v380 = vmul.f32 %v360, %v376
  %v381 = vmul.f32 %v361, %v377
  %v382 = vmul.f32 %v362, %v378
  %v383 = vmul.f32 %v363, %v379
  %vm384 = vcmask 523264
  %v386 = vsel %vm384, %v380, 0
  %v389 = vsel %vm384, %v381, 0
  %v392 = vsel %vm384, %v382, 0
  %v395 = vsel %vm384, %v383, 0
  %397 = vmatprep.subr.mxu0 0.0
  %398 = vmatpush1.msra.mxu0 %v18
  %399 = vmatprep.subr.mxu0 0.0
  %400 = vmatpush1.msra.mxu0 %v19
  %401 = vmatprep.subr.mxu0 0.0
  %402 = vmatpush1.msra.mxu0 %v20
  %403 = vmatprep.subr.mxu0 0.0
  %404 = vmatpush1.msra.mxu0 %v21
  %405 = vmatprep.subr.mxu0 0.0
  %406 = vmatpush1.msra.mxu0 %v22
  %407 = vmatprep.subr.mxu0 0.0
  %408 = vmatpush1.msra.mxu0 %v23
  %409 = vmatprep.subr.mxu0 0.0
  %410 = vmatpush1.msra.mxu0 %v24
  %411 = vmatprep.subr.mxu0 0.0
  %412 = vmatpush1.msra.mxu0 %v25
  %413 = vmatprep.subr.mxu0 0.0
  %414 = vmatpush1.msra.mxu0 0.0
  %415 = vmatprep.subr.mxu0 0.0
  %416 = vmatpush1.msra.mxu0 0.0
  %417 = vmatprep.subr.mxu0 0.0
  %418 = vmatpush1.msra.mxu0 0.0
  %419 = vmatprep.subr.mxu0 0.0
  %420 = vmatpush1.msra.mxu0 0.0
  %421 = vmatprep.subr.mxu0 0.0
  %422 = vmatpush1.msra.mxu0 0.0
  %423 = vmatprep.subr.mxu0 0.0
  %424 = vmatpush1.msra.mxu0 0.0
  %425 = vmatprep.subr.mxu0 0.0
  %426 = vmatpush1.msra.mxu0 0.0
  %427 = vmatprep.subr.mxu0 0.0
  %428 = vmatpush1.msra.mxu0 0.0
  %429 = vmatprep.subr.mxu0 0.0
  %430 = vmatpush1.msra.mxu0 0.0
  %431 = vmatprep.subr.mxu0 0.0
  %432 = vmatpush1.msra.mxu0 0.0
  %433 = vmatprep.subr.mxu0 0.0
  %434 = vmatpush1.msra.mxu0 0.0
  %435 = vmatprep.subr.mxu0 0.0
  %436 = vmatpush1.msra.mxu0 0.0
  %437 = vmatprep.subr.mxu0 0.0
  %438 = vmatpush1.msra.mxu0 0.0
  %439 = vmatprep.subr.mxu0 0.0
  %440 = vmatpush1.msra.mxu0 0.0
  %441 = vmatprep.subr.mxu0 0.0
  %442 = vmatpush1.msra.mxu0 0.0
  %443 = vmatprep.subr.mxu0 0.0
  %444 = vmatpush1.msra.mxu0 0.0
  %445 = vmatprep.subr.mxu0 0.0
  %446 = vmatpush1.msra.mxu0 0.0
  %447 = vmatprep.subr.mxu0 0.0
  %448 = vmatpush1.msra.mxu0 0.0
  %449 = vmatprep.subr.mxu0 0.0
  %450 = vmatpush1.msra.mxu0 0.0
  %451 = vmatprep.subr.mxu0 0.0
  %452 = vmatpush1.msra.mxu0 0.0
  %453 = vmatprep.subr.mxu0 0.0
  %454 = vmatpush1.msra.mxu0 0.0
  %455 = vmatprep.subr.mxu0 0.0
  %456 = vmatpush1.msra.mxu0 0.0
  %457 = vmatprep.subr.mxu0 0.0
  %458 = vmatpush1.msra.mxu0 0.0
  %459 = vmatprep.subr.mxu0 0.0
  %460 = vmatpush1.msra.mxu0 0.0
  %461 = vmatprep.mubr.f32.mxu0 0.0
  %462 = vmatmul.mubr.f32.gmra.mrb[0].mxu0 %v386
  %v463 = vpop.f32.mrb[0].mxu0
  %v464 = vadd.f32 0.0, %v463
  %v465 = vpop.f32.mrb[0].mxu0
  %466 = vmatprep.mubr.f32.mxu0 0.0
  %467 = vmatmul.mubr.f32.gmra.mrb[0].mxu0 %v389
  %v468 = vpop.f32.mrb[0].mxu0
  %v469 = vadd.f32 0.0, %v468
  %v470 = vpop.f32.mrb[0].mxu0
  %471 = vmatprep.mubr.f32.mxu0 0.0
  %472 = vmatmul.mubr.f32.gmra.mrb[0].mxu0 %v392
  %v473 = vpop.f32.mrb[0].mxu0
  %v474 = vadd.f32 0.0, %v473
  %v475 = vpop.f32.mrb[0].mxu0
  %476 = vmatprep.mubr.f32.mxu0 0.0
  %477 = vmatmul.mubr.f32.gmra.mrb[0].mxu0 %v395
  %v478 = vpop.f32.mrb[0].mxu0
  %v479 = vadd.f32 0.0, %v478
  %v480 = vpop.f32.mrb[0].mxu0
  %481 = vdwg.mxu0
  %v482 = vlaneseq
  %v483 = vshrl.u32 %v482, 7
  %v484 = vadd.s32 %v483, 8
  %v485 = vadd.s32 %v483, 16
  %v486 = vadd.s32 %v483, 24
  %vm487 = vcmp.lt.s32.totalorder %v483, 0
  %v488 = vsub.s32 0, %v483
  %v489 = vsel %vm487, %v488, %v483
  %v490 = vshrl.u32 %v489, 4
  %v491 = vand.u32 %v489, 15
  %v492 = vsub.s32 0, %v491
  %v493 = vsel %vm487, %v492, %v491
  %vm494 = vcmp.lt.s32.totalorder %v484, 0
  %v495 = vsub.s32 0, %v484
  %v496 = vsel %vm494, %v495, %v484
  %v497 = vshrl.u32 %v496, 4
  %v498 = vand.u32 %v496, 15
  %v499 = vsub.s32 0, %v498
  %v500 = vsel %vm494, %v499, %v498
  %vm501 = vcmp.lt.s32.totalorder %v485, 0
  %v502 = vsub.s32 0, %v485
  %v503 = vsel %vm501, %v502, %v485
  %v504 = vshrl.u32 %v503, 4
  %v505 = vand.u32 %v503, 15
  %v506 = vsub.s32 0, %v505
  %v507 = vsel %vm501, %v506, %v505
  %vm508 = vcmp.lt.s32.totalorder %v486, 0
  %v509 = vsub.s32 0, %v486
  %v510 = vsel %vm508, %v509, %v486
  %v511 = vshrl.u32 %v510, 4
  %v512 = vand.u32 %v510, 15
  %v513 = vsub.s32 0, %v512
  %v514 = vsel %vm508, %v513, %v512
  %vm515 = vcmp.ne.s32.totalorder %v493, 0
  %vm516 = vcmp.ne.s32.totalorder %v500, 0
  %vm517 = vcmp.ne.s32.totalorder %v507, 0
  %vm518 = vcmp.ne.s32.totalorder %v514, 0
  %vm519 = vcmp.lt.s32.totalorder %v493, 0
  %vm520 = vcmp.lt.s32.totalorder %v500, 0
  %vm521 = vcmp.lt.s32.totalorder %v507, 0
  %vm522 = vcmp.lt.s32.totalorder %v514, 0
  %vm523 = vmand %vm519, %vm515
  %vm524 = vmand %vm520, %vm516
  %vm525 = vmand %vm521, %vm517
  %vm526 = vmand %vm522, %vm518
  %v527 = vadd.s32 %v493, 16
  %v528 = vadd.s32 %v500, 16
  %v529 = vadd.s32 %v507, 16
  %v530 = vadd.s32 %v514, 16
  %v531 = vsel %vm523, %v527, %v493
  %v532 = vsel %vm524, %v528, %v500
  %v533 = vsel %vm525, %v529, %v507
  %v534 = vsel %vm526, %v530, %v514
  %vm535 = vcmp.lt.s32.totalorder %v531, 15
  %vm536 = vcmp.lt.s32.totalorder %v532, 15
  %vm537 = vcmp.lt.s32.totalorder %v533, 15
  %vm538 = vcmp.lt.s32.totalorder %v534, 15
  %v539 = vsel %vm535, %v464, 0.0
  %v540 = vsel %vm536, %v469, 0.0
  %v541 = vsel %vm537, %v474, 0.0
  %v542 = vsel %vm538, %v479, 0.0
  %v544 = vsel %vm38, %v30, 0
  %v547 = vsel %vm38, %v31, 0
  %v550 = vsel %vm38, %v32, 0
  %v553 = vsel %vm38, %v33, 0
  %555 = vmatprep.subr.mxu0 0.0
  %556 = vmatpush1.msra.mxu0 %v539
  %557 = vmatprep.subr.mxu0 0.0
  %558 = vmatpush1.msra.mxu0 %v540
  %559 = vmatprep.subr.mxu0 0.0
  %560 = vmatpush1.msra.mxu0 %v541
  %561 = vmatprep.subr.mxu0 0.0
  %562 = vmatpush1.msra.mxu0 %v542
  %563 = vmatprep.subr.mxu0 0.0
  %564 = vmatpush1.msra.mxu0 0.0
  %565 = vmatprep.subr.mxu0 0.0
  %566 = vmatpush1.msra.mxu0 0.0
  %567 = vmatprep.subr.mxu0 0.0
  %568 = vmatpush1.msra.mxu0 0.0
  %569 = vmatprep.subr.mxu0 0.0
  %570 = vmatpush1.msra.mxu0 0.0
  %571 = vmatprep.subr.mxu0 0.0
  %572 = vmatpush1.msra.mxu0 0.0
  %573 = vmatprep.subr.mxu0 0.0
  %574 = vmatpush1.msra.mxu0 0.0
  %575 = vmatprep.subr.mxu0 0.0
  %576 = vmatpush1.msra.mxu0 0.0
  %577 = vmatprep.subr.mxu0 0.0
  %578 = vmatpush1.msra.mxu0 0.0
  %579 = vmatprep.subr.mxu0 0.0
  %580 = vmatpush1.msra.mxu0 0.0
  %581 = vmatprep.subr.mxu0 0.0
  %582 = vmatpush1.msra.mxu0 0.0
  %583 = vmatprep.subr.mxu0 0.0
  %584 = vmatpush1.msra.mxu0 0.0
  %585 = vmatprep.subr.mxu0 0.0
  %586 = vmatpush1.msra.mxu0 0.0
  %587 = vmatprep.subr.mxu0 0.0
  %588 = vmatpush1.msra.mxu0 0.0
  %589 = vmatprep.subr.mxu0 0.0
  %590 = vmatpush1.msra.mxu0 0.0
  %591 = vmatprep.subr.mxu0 0.0
  %592 = vmatpush1.msra.mxu0 0.0
  %593 = vmatprep.subr.mxu0 0.0
  %594 = vmatpush1.msra.mxu0 0.0
  %595 = vmatprep.subr.mxu0 0.0
  %596 = vmatpush1.msra.mxu0 0.0
  %597 = vmatprep.subr.mxu0 0.0
  %598 = vmatpush1.msra.mxu0 0.0
  %599 = vmatprep.subr.mxu0 0.0
  %600 = vmatpush1.msra.mxu0 0.0
  %601 = vmatprep.subr.mxu0 0.0
  %602 = vmatpush1.msra.mxu0 0.0
  %603 = vmatprep.subr.mxu0 0.0
  %604 = vmatpush1.msra.mxu0 0.0
  %605 = vmatprep.subr.mxu0 0.0
  %606 = vmatpush1.msra.mxu0 0.0
  %607 = vmatprep.subr.mxu0 0.0
  %608 = vmatpush1.msra.mxu0 0.0
  %609 = vmatprep.subr.mxu0 0.0
  %610 = vmatpush1.msra.mxu0 0.0
  %611 = vmatprep.subr.mxu0 0.0
  %612 = vmatpush1.msra.mxu0 0.0
  %613 = vmatprep.subr.mxu0 0.0
  %614 = vmatpush1.msra.mxu0 0.0
  %615 = vmatprep.subr.mxu0 0.0
  %616 = vmatpush1.msra.mxu0 0.0
  %617 = vmatprep.subr.mxu0 0.0
  %618 = vmatpush1.msra.mxu0 0.0
  %619 = vmatprep.mubr.f32.mxu0 0.0
  %620 = vmatmul.mubr.f32.gmra.mrb[0].mxu0 %v544
  %v621 = vpop.f32.mrb[0].mxu0
  %v622 = vadd.f32 0.0, %v621
  %v623 = vpop.f32.mrb[0].mxu0
  %624 = vmatprep.mubr.f32.mxu0 0.0
  %625 = vmatmul.mubr.f32.gmra.mrb[0].mxu0 %v547
  %v626 = vpop.f32.mrb[0].mxu0
  %v627 = vadd.f32 0.0, %v626
  %v628 = vpop.f32.mrb[0].mxu0
  %629 = vmatprep.mubr.f32.mxu0 0.0
  %630 = vmatmul.mubr.f32.gmra.mrb[0].mxu0 %v550
  %v631 = vpop.f32.mrb[0].mxu0
  %v632 = vadd.f32 0.0, %v631
  %v633 = vpop.f32.mrb[0].mxu0
  %634 = vmatprep.mubr.f32.mxu0 0.0
  %635 = vmatmul.mubr.f32.gmra.mrb[0].mxu0 %v553
  %v636 = vpop.f32.mrb[0].mxu0
  %v637 = vadd.f32 0.0, %v636
  %v638 = vpop.f32.mrb[0].mxu0
  %639 = vdwg.mxu0
  %644 = vrot.lane.b32.xlu0 %v622, 120
  %v645 = vpop.permute.xlu0 %644
  %646 = vrot.lane.b32.xlu0 %v627, 120
  %v647 = vpop.permute.xlu0 %646
  %648 = vrot.lane.b32.xlu0 %v632, 120
  %v649 = vpop.permute.xlu0 %648
  %650 = vrot.lane.b32.xlu0 %v637, 120
  %v651 = vpop.permute.xlu0 %650
  %v656 = vadd.f32 %v539, %v645
  %v657 = vadd.f32 %v540, %v647
  %v658 = vadd.f32 %v541, %v649
  %v659 = vadd.f32 %v542, %v651
  %664 = vrot.lane.b32.xlu0 %v656, 120
  %v665 = vpop.permute.xlu0 %664
  %666 = vrot.lane.b32.xlu0 %v657, 120
  %v667 = vpop.permute.xlu0 %666
  %668 = vrot.lane.b32.xlu0 %v658, 120
  %v669 = vpop.permute.xlu0 %668
  %670 = vrot.lane.b32.xlu0 %v659, 120
  %v671 = vpop.permute.xlu0 %670
  %v676 = vsel %vm152, %v656, %v665
  %v677 = vsel %vm152, %v657, %v667
  %v678 = vsel %vm152, %v658, %v669
  %v679 = vsel %vm152, %v659, %v671
  %680 = vst.msk [vmem:[%s2] sm:$0xff] %vm157, %v676
  %681 = vst.msk [vmem:[%s2 + $0x8] sm:$0xff] %vm157, %v677
  %682 = vst.msk [vmem:[%s2 + $0x10] sm:$0xff] %vm157, %v678
  %683 = vst.msk [vmem:[%s2 + $0x18] sm:$0xff] %vm157, %v679
  // Predicated region
  $region10: #{encoder_masker_decoder_forward.1} parent=0 // pred_check
    _
  $region11: #{encoder_masker_decoder_forward.1} parent=0 // pred_check_branch
    %685 = sbr.rel (0) target = $region13
  $region12: #{encoder_masker_decoder_forward.1} parent=0 // pred_region
    _
  $region13: #{encoder_masker_decoder_forward.1} parent=0 // pred_fallthru
    _
  // Predicated region
  $region14: #{encoder_masker_decoder_forward.1} parent=0 // pred_check
    _
  $region15: #{encoder_masker_decoder_forward.1} parent=0 // pred_check_branch
    %687 = sbr.rel (0) target = $region17
  $region16: #{encoder_masker_decoder_forward.1} parent=0 // pred_region
    _
  $region17: #{encoder_masker_decoder_forward.1} parent=0 // pred_fallthru
    _

</llo_original>
